<compile_context>
chip_gen: v7x
topology: tpu7x:2x2x1
jax: 0.10.0
libtpu: 0.0.40
codegen_flags: <defaults>
</compile_context>

<pallas_src>
import functools

import jax
import jax.numpy as jnp
from jax.experimental import pallas as pl
from jax.experimental.pallas import tpu as pltpu


# ----------------------------------------------------------------------------
# Per-generation tiling / VMEM configuration
# ----------------------------------------------------------------------------
def _tpu_config():
    vmem = 64 << 20
    try:
        vmem = int(pltpu.get_tpu_info().vmem_capacity_bytes)
    except Exception:
        pass
    if vmem >= (120 << 20):
        # v5e / v6e: 128 MiB VMEM -> big tiles, generous scoped limit.
        return {"l_cap": 256, "vmem_limit": 100 << 20, "attn_budget": 40 << 20}
    # v7x: 64 MiB VMEM per TensorCore -> stay under the 48 MiB practical limit.
    return {"l_cap": 128, "vmem_limit": 48 << 20, "attn_budget": 16 << 20}


def _round_up(x, m):
    return ((x + m - 1) // m) * m


def _sublane_mult(dtype):
    # Native VMEM tile is (8,128) for 32-bit, (16,128) for bf16, (32,128) int8.
    return max(8, 32 // jnp.dtype(dtype).itemsize)


def _choose_l_tile(L, cap, mult, attn_row_bytes=0, attn_budget=0):
    """L-tile: sublane-aligned, MXU-friendly, optionally attn-VMEM-budgeted."""
    if attn_row_bytes and attn_budget:
        budget_rows = (attn_budget // (2 * attn_row_bytes) // mult) * mult
        cap = min(cap, max(mult, budget_rows))
    cap = max(mult, (cap // mult) * mult)
    if L <= cap:
        return _round_up(L, mult)
    # Prefer the MXU-friendly cap with a padded last tile when padding is cheap.
    pad = _round_up(L, cap) - L
    if pad == 0 or pad * 8 <= L:
        return cap
    t = cap - mult
    while t >= mult:
        if L % t == 0:
            return t
        t -= mult
    return cap


def _divisor_tile(S, cap, mult):
    """Largest tile <= cap dividing S exactly (source rows must never be
    padded: padded K rows would corrupt the softmax denominator); else full S."""
    if S <= cap:
        return S
    t = (cap // mult) * mult
    while t >= mult:
        if S % t == 0:
            return t
        t -= mult
    return S


# ----------------------------------------------------------------------------
# Kernel 1: K / V projection of the source (once per layer, per batch).
# ----------------------------------------------------------------------------
def _kv_proj_kernel(src_ref, wk_ref, wv_ref, k_ref, v_ref):
    src = src_ref[0]                                              # (tS, C)
    k_ref[0] = jnp.dot(src, wk_ref[...],
                       preferred_element_type=jnp.float32).astype(k_ref.dtype)
    v_ref[0] = jnp.dot(src, wv_ref[...],
                       preferred_element_type=jnp.float32).astype(v_ref.dtype)


def _project_kv(source, wk, wv, cfg):
    N, S, C = source.shape
    s_tile = _divisor_tile(S, cfg["l_cap"], _sublane_mult(source.dtype))
    return pl.pallas_call(
        _kv_proj_kernel,
        out_shape=(jax.ShapeDtypeStruct((N, S, C), source.dtype),
                   jax.ShapeDtypeStruct((N, S, C), source.dtype)),
        grid=(N, S // s_tile),
        in_specs=[pl.BlockSpec((1, s_tile, C), lambda b, s: (b, s, 0)),
                  pl.BlockSpec((C, C), lambda b, s: (0, 0)),
                  pl.BlockSpec((C, C), lambda b, s: (0, 0))],
        out_specs=(pl.BlockSpec((1, s_tile, C), lambda b, s: (b, s, 0)),
                   pl.BlockSpec((1, s_tile, C), lambda b, s: (b, s, 0))),
        compiler_params=pltpu.CompilerParams(
            dimension_semantics=("parallel", "parallel"),
            vmem_limit_bytes=cfg["vmem_limit"]),
    )(source, wk, wv)


# ----------------------------------------------------------------------------
# Kernel 2: one LoFTREncoderLayer forward for one (batch, L-tile) grid point.
# ----------------------------------------------------------------------------
def _loftr_layer_kernel(
    x_ref, k_ref, v_ref,
    wq_ref, wm_ref,
    g1_ref, b1_ref,
    w1a_ref, w1b_ref, w2_ref,
    g2_ref, b2_ref,
    out_ref, *rest,
    nhead, emit_attn,
):
    attn_ref = rest[0] if emit_attn else None
    cdt = x_ref.dtype  # MXU operand dtype: bf16 stays bf16, f32 stays f32.

    x = x_ref[0]                                                  # (TL, C)
    k = k_ref[0]                                                  # (S, C)
    v = v_ref[0]                                                  # (S, C)
    TL, C = x.shape
    D = C // nhead

    # Wq already carries the 1/sqrt(D) softmax temperature (folded in wrapper).
    q = jnp.dot(x, wq_ref[...], preferred_element_type=jnp.float32).astype(cdt)

    # --- exact softmax attention, head by head (nhead small & static) -------
    msgs = []
    for h in range(nhead):
        qh = q[:, h * D:(h + 1) * D]                              # (TL, D)
        kh = k[:, h * D:(h + 1) * D]                              # (S, D)
        vh = v[:, h * D:(h + 1) * D]                              # (S, D)

        scores = jax.lax.dot_general(                             # q @ k^T
            qh, kh, (((1,), (1,)), ((), ())),
            preferred_element_type=jnp.float32)                   # (TL, S)
        m = jnp.max(scores, axis=-1, keepdims=True)
        e = jnp.exp(scores - m)                                   # unnormalized
        denom = jnp.sum(e, axis=-1, keepdims=True)
        inv = 1.0 / denom                                         # exact, (TL,1)

        # Normalize AFTER A@V: scale the (TL, D) message, not the (TL, S) probs.
        msg = jnp.dot(e.astype(cdt), vh, preferred_element_type=jnp.float32)
        msgs.append(msg * inv)

        if emit_attn:
            attn_ref[0, h] = (e * inv).astype(attn_ref.dtype)     # lane-dense S

    # Assemble the (TL, C) message with a single lane-dense concat.
    message = jnp.concatenate(msgs, axis=-1)

    # --- merge + LayerNorm1 (fused moments: var = E[x^2] - mu^2) -------------
    message = jnp.dot(message.astype(cdt), wm_ref[...],
                      preferred_element_type=jnp.float32)
    mu = jnp.mean(message, axis=-1, keepdims=True)
    ms = jnp.mean(message * message, axis=-1, keepdims=True)
    var = jnp.maximum(ms - mu * mu, 0.0)
    message = (message - mu) * jax.lax.rsqrt(var + 1e-5)
    message = message * g1_ref[0] + b1_ref[0]

    # --- MLP on concat([x, message]) (weight split -> two matmuls), LN2 -----
    hdn = (jnp.dot(x, w1a_ref[...], preferred_element_type=jnp.float32)
           + jnp.dot(message.astype(cdt), w1b_ref[...],
                     preferred_element_type=jnp.float32))
    hdn = jnp.maximum(hdn, 0.0)
    hdn = jnp.dot(hdn.astype(cdt), w2_ref[...],
                  preferred_element_type=jnp.float32)
    mu2 = jnp.mean(hdn, axis=-1, keepdims=True)
    ms2 = jnp.mean(hdn * hdn, axis=-1, keepdims=True)
    var2 = jnp.maximum(ms2 - mu2 * mu2, 0.0)
    hdn = (hdn - mu2) * jax.lax.rsqrt(var2 + 1e-5)
    hdn = hdn * g2_ref[0] + b2_ref[0]

    # Residual
    out_ref[0] = (x.astype(jnp.float32) + hdn).astype(out_ref.dtype)


# ----------------------------------------------------------------------------
# Cost estimate (advisory)
# ----------------------------------------------------------------------------
def _cost_estimate(N, L, S, C, nhead, emit_attn, itemsize, attn_itemsize):
    flops = N * (
        2 * L * C * C                  # q projection
        + 4 * L * S * C                # q@k^T and e@v across all heads
        + 2 * L * C * C                # merge
        + 2 * L * (2 * C) * (2 * C)    # mlp layer 1
        + 2 * L * (2 * C) * C          # mlp layer 2
    )
    transcendentals = N * nhead * L * S
    bytes_accessed = itemsize * N * (2 * L * C + 2 * S * C) + 4 * 10 * C * C
    if emit_attn:
        bytes_accessed += attn_itemsize * N * nhead * L * S
    return pl.CostEstimate(flops=int(flops),
                           transcendentals=int(transcendentals),
                           bytes_accessed=int(bytes_accessed))


# ----------------------------------------------------------------------------
# Wrapper: one LoFTREncoderLayer
# ----------------------------------------------------------------------------
def loftr_layer(x, source, params, nhead, *, emit_attn=False, l_tile=None,
                attn_dtype=None):
    """One LoFTREncoderLayer forward. Returns (new_x, attn_map or None)."""
    N, L, C = x.shape
    S = source.shape[1]
    assert C % nhead == 0
    D = C // nhead
    cdt = x.dtype
    if attn_dtype is None:
        attn_dtype = cdt   # bf16 features -> bf16 attn map (halves writeback)

    cfg = _tpu_config()
    sub = _sublane_mult(cdt)
    if l_tile is None:
        attn_row_bytes = (nhead * S * jnp.dtype(attn_dtype).itemsize
                          if emit_attn else 0)
        l_tile = _choose_l_tile(L, cfg["l_cap"], sub,
                                attn_row_bytes, cfg["attn_budget"])
    Lp = _round_up(L, l_tile)

    # Fold the 1/sqrt(D) temperature into Wq once (zero in-kernel cost).
    scale = 1.0 / float(D) ** 0.5
    wq = (params["wq"].astype(jnp.float32) * scale).astype(cdt)
    wk = params["wk"].astype(cdt)
    wv = params["wv"].astype(cdt)
    wm = params["wm"].astype(cdt)
    w1 = params["w_mlp1"].astype(cdt)
    w1a, w1b = w1[:C], w1[C:]          # split once so the kernel never concats
    w2 = params["w_mlp2"].astype(cdt)
    g1, b1 = params["g1"], params["b1"]
    g2, b2 = params["g2"], params["b2"]

    # K / V projections hoisted into their own tiny pallas_call (per-batch).
    k, v = _project_kv(source, wk, wv, cfg)

    # Pad query rows only (zero rows give finite results and are sliced off).
    x_p = x if Lp == L else jnp.pad(x, ((0, 0), (0, Lp - L), (0, 0)))

    kernel = functools.partial(_loftr_layer_kernel, nhead=nhead,
                               emit_attn=emit_attn)
    const = lambda shape: pl.BlockSpec(shape, lambda b, l: (0, 0))
    in_specs = [
        pl.BlockSpec((1, l_tile, C), lambda b, l: (b, l, 0)),   # x (L-tiled)
        pl.BlockSpec((1, S, C), lambda b, l: (b, 0, 0)),        # K (resident/batch)
        pl.BlockSpec((1, S, C), lambda b, l: (b, 0, 0)),        # V (resident/batch)
        const((C, C)), const((C, C)),                           # wq, wm
        const((1, C)), const((1, C)),                           # g1, b1
        const((C, 2 * C)), const((C, 2 * C)), const((2 * C, C)),
        const((1, C)), const((1, C)),                           # g2, b2
    ]

    if emit_attn:
        out_shape = (jax.ShapeDtypeStruct((N, Lp, C), x.dtype),
                     jax.ShapeDtypeStruct((N, nhead, Lp, S), attn_dtype))
        out_specs = (pl.BlockSpec((1, l_tile, C), lambda b, l: (b, l, 0)),
                     pl.BlockSpec((1, nhead, l_tile, S),
                                  lambda b, l: (b, 0, l, 0)))
    else:
        out_shape = jax.ShapeDtypeStruct((N, Lp, C), x.dtype)
        out_specs = pl.BlockSpec((1, l_tile, C), lambda b, l: (b, l, 0))

    res = pl.pallas_call(
        kernel,
        out_shape=out_shape,
        grid=(N, Lp // l_tile),
        in_specs=in_specs,
        out_specs=out_specs,
        compiler_params=pltpu.CompilerParams(
            # No cross-step dependency left: both axes parallel (v7x dual-TC).
            dimension_semantics=("parallel", "parallel"),
            vmem_limit_bytes=cfg["vmem_limit"]),
        cost_estimate=_cost_estimate(N, Lp, S, C, nhead, emit_attn,
                                     jnp.dtype(cdt).itemsize,
                                     jnp.dtype(attn_dtype).itemsize),
    )(x_p, k, v, wq, wm, g1, b1, w1a, w1b, w2, g2, b2)

    if emit_attn:
        out, attn = res
        if Lp != L:
            out, attn = out[:, :L], attn[:, :, :L]
        return out, attn
    out = res
    if Lp != L:
        out = out[:, :L]
    return out, None


# ----------------------------------------------------------------------------
# Parameter construction (Xavier-uniform for dim>1, matching _reset_parameters).
# Weights are stored as (in, out) so the kernel computes y = x @ W.
# ----------------------------------------------------------------------------
def _xavier_uniform(key, fan_in, fan_out, shape):
    bound = jnp.sqrt(6.0 / (fan_in + fan_out))
    return jax.random.uniform(key, shape, jnp.float32, -bound, bound)


def make_layer_params(key, d_model):
    c = d_model
    ks = jax.random.split(key, 6)
    return {
        "wq": _xavier_uniform(ks[0], c, c, (c, c)),
        "wk": _xavier_uniform(ks[1], c, c, (c, c)),
        "wv": _xavier_uniform(ks[2], c, c, (c, c)),
        "wm": _xavier_uniform(ks[3], c, c, (c, c)),
        "g1": jnp.ones((1, c), jnp.float32),
        "b1": jnp.zeros((1, c), jnp.float32),
        "w_mlp1": _xavier_uniform(ks[4], 2 * c, 2 * c, (2 * c, 2 * c)),
        "w_mlp2": _xavier_uniform(ks[5], 2 * c, c, (2 * c, c)),
        "g2": jnp.ones((1, c), jnp.float32),
        "b2": jnp.zeros((1, c), jnp.float32),
    }


def local_feature_transformer(feat0, feat1, params_list, layer_names, nhead):
    """LocalFeatureTransformer.forward (masks=None, aliasing_filter=False)."""
    cross_idx = [i for i, n in enumerate(layer_names) if n == "cross"]
    last_cross = cross_idx[-1] if cross_idx else -1
    atten_weight = None
    for i, (params, name) in enumerate(zip(params_list, layer_names)):
        if name == "self":
            # Attention map never observed for 'self' layers -> not emitted.
            feat0, _ = loftr_layer(feat0, feat0, params, nhead, emit_attn=False)
        elif name == "cross":
            # Only the last cross layer's attention map is observable (module
            # attribute is overwritten), so only that one writes attn.
            emit = (i == last_cross)
            feat0, a = loftr_layer(feat0, feat1, params, nhead, emit_attn=emit)
            if emit:
                atten_weight = a
        else:
            raise KeyError(name)
    return feat0, atten_weight


if __name__ == "__main__":
    # Small, module-consistent shapes: feat0 [N, L, C], feat1 [N, S, C].
    N, L, S, C, NHEAD = 2, 8, 8, 32, 4
    layer_names = ["self", "cross"]

    key = jax.random.PRNGKey(0)
    k_f0, k_f1, k_p = jax.random.split(key, 3)
    feat0 = jax.random.normal(k_f0, (N, L, C), jnp.float32)
    feat1 = jax.random.normal(k_f1, (N, S, C), jnp.float32)

    layer_keys = jax.random.split(k_p, len(layer_names))
    params_list = [make_layer_params(k, C) for k in layer_keys]

    out, attn = local_feature_transformer(feat0, feat1, params_list,
                                          layer_names, NHEAD)
    out = jax.block_until_ready(out)
    attn = jax.block_until_ready(attn)

    assert out.shape == (N, L, C)
    assert attn is not None and attn.shape == (N, NHEAD, L, S)
    assert jnp.all(jnp.isfinite(out))
    assert jnp.all(jnp.isfinite(attn))
    print("KERNEL_OK")
</pallas_src>

<mosaic_0001>
module attributes {stable_mosaic.version = 11 : i64} {
  func.func @_kv_proj_kernel(%arg0: i32, %arg1: i32, %arg2: memref<1x8x32xf32, #tpu.memory_space<vmem>>, %arg3: memref<32x32xf32, #tpu.memory_space<vmem>>, %arg4: memref<32x32xf32, #tpu.memory_space<vmem>>, %arg5: memref<1x8x32xf32, #tpu.memory_space<vmem>>, %arg6: memref<1x8x32xf32, #tpu.memory_space<vmem>>) attributes {dimension_semantics = [#tpu.dimension_semantics<parallel>, #tpu.dimension_semantics<parallel>], iteration_bounds = array<i64: 2, 1>, scalar_prefetch = 0 : i64, scratch_operands = 0 : i64, tpu.core_type = #tpu.core_type<tc>, window_params = [{transform_indices = @transform_0, window_bounds = array<i64: 1, 8, 32>}, {pipeline_mode = #tpu.pipeline_mode<synchronous>, transform_indices = @transform_1, window_bounds = array<i64: 32, 32>}, {pipeline_mode = #tpu.pipeline_mode<synchronous>, transform_indices = @transform_2, window_bounds = array<i64: 32, 32>}, {transform_indices = @transform_3, window_bounds = array<i64: 1, 8, 32>}, {transform_indices = @transform_4, window_bounds = array<i64: 1, 8, 32>}]} {
    %c0 = arith.constant 0 : index
    %c0_0 = arith.constant 0 : index
    %c0_1 = arith.constant 0 : index
    %0 = vector.load %arg2[%c0, %c0_0, %c0_1] : memref<1x8x32xf32, #tpu.memory_space<vmem>>, vector<1x8x32xf32>
    %1 = vector.shape_cast %0 : vector<1x8x32xf32> to vector<8x32xf32>
    %c0_2 = arith.constant 0 : index
    %c0_3 = arith.constant 0 : index
    %2 = vector.load %arg3[%c0_2, %c0_3] : memref<32x32xf32, #tpu.memory_space<vmem>>, vector<32x32xf32>
    %cst = arith.constant dense<0.000000e+00> : vector<8x32xf32>
    %3 = tpu.matmul %1, %2, %cst {dimension_numbers = #tpu.dot_dimension_numbers<[1], [0], [0], [1], [0, 0, 1, 1], [], []>} : vector<8x32xf32>, vector<32x32xf32>, vector<8x32xf32> -> vector<8x32xf32>
    %c0_4 = arith.constant 0 : index
    %c0_5 = arith.constant 0 : index
    %c0_6 = arith.constant 0 : index
    %4 = vector.load %arg5[%c0_4, %c0_5, %c0_6] : memref<1x8x32xf32, #tpu.memory_space<vmem>>, vector<1x8x32xf32>
    %5 = vector.shape_cast %4 : vector<1x8x32xf32> to vector<8x32xf32>
    %6 = vector.shape_cast %3 : vector<8x32xf32> to vector<1x8x32xf32>
    tpu.vector_store %arg5[%c0_4, %c0_5, %c0_6], %6 {strides = array<i32>} : memref<1x8x32xf32, #tpu.memory_space<vmem>>, vector<1x8x32xf32>,
    %c0_7 = arith.constant 0 : index
    %c0_8 = arith.constant 0 : index
    %7 = vector.load %arg4[%c0_7, %c0_8] : memref<32x32xf32, #tpu.memory_space<vmem>>, vector<32x32xf32>
    %cst_9 = arith.constant dense<0.000000e+00> : vector<8x32xf32>
    %8 = tpu.matmul %1, %7, %cst_9 {dimension_numbers = #tpu.dot_dimension_numbers<[1], [0], [0], [1], [0, 0, 1, 1], [], []>} : vector<8x32xf32>, vector<32x32xf32>, vector<8x32xf32> -> vector<8x32xf32>
    %c0_10 = arith.constant 0 : index
    %c0_11 = arith.constant 0 : index
    %c0_12 = arith.constant 0 : index
    %9 = vector.load %arg6[%c0_10, %c0_11, %c0_12] : memref<1x8x32xf32, #tpu.memory_space<vmem>>, vector<1x8x32xf32>
    %10 = vector.shape_cast %9 : vector<1x8x32xf32> to vector<8x32xf32>
    %11 = vector.shape_cast %8 : vector<8x32xf32> to vector<1x8x32xf32>
    tpu.vector_store %arg6[%c0_10, %c0_11, %c0_12], %11 {strides = array<i32>} : memref<1x8x32xf32, #tpu.memory_space<vmem>>, vector<1x8x32xf32>,
    return
  }
  func.func @transform_0(%arg0: i32, %arg1: i32) -> (i32, i32, i32) {
    %c0_i32 = arith.constant 0 : i32
    %c0_i32_0 = arith.constant 0 : i32
    return %arg0, %arg1, %c0_i32 : i32, i32, i32
  }
  func.func @transform_1(%arg0: i32, %arg1: i32) -> (i32, i32) {
    %c0_i32 = arith.constant 0 : i32
    %c0_i32_0 = arith.constant 0 : i32
    %c0_i32_1 = arith.constant 0 : i32
    return %c0_i32, %c0_i32_0 : i32, i32
  }
  func.func @transform_2(%arg0: i32, %arg1: i32) -> (i32, i32) {
    %c0_i32 = arith.constant 0 : i32
    %c0_i32_0 = arith.constant 0 : i32
    %c0_i32_1 = arith.constant 0 : i32
    return %c0_i32, %c0_i32_0 : i32, i32
  }
  func.func @transform_3(%arg0: i32, %arg1: i32) -> (i32, i32, i32) {
    %c0_i32 = arith.constant 0 : i32
    %c0_i32_0 = arith.constant 0 : i32
    return %arg0, %arg1, %c0_i32 : i32, i32, i32
  }
  func.func @transform_4(%arg0: i32, %arg1: i32) -> (i32, i32, i32) {
    %c0_i32 = arith.constant 0 : i32
    %c0_i32_0 = arith.constant 0 : i32
    return %arg0, %arg1, %c0_i32 : i32, i32, i32
  }
}

</mosaic_0001>

<llo_original>
// kernel: tpu_custom_call.1
$region0: #{tpu_custom_call.1}
  #allocation0 [shape = 'u32[]', space=smem, size = 0x4, offset = 0x4, fixed_abs, tag = 'smem constant byte address 0x4 - core index']
  #allocation1 [shape = 'u32[144,128]{1,0:T(1,128)}', space=vmem, size = 0x12000, scoped, tag = 'internal scratch']
  %s0 = inlined_call_operand.hbm [shape: f32[2,8,32], index: 0, kind: input, shape index: {}]
  %s1 = inlined_call_operand.hbm [shape: f32[32,32], index: 1, kind: input, shape index: {}]
  %s2 = inlined_call_operand.hbm [shape: f32[32,32], index: 2, kind: input, shape index: {}]
  %s3 = inlined_call_operand.hbm [shape: f32[2,8,32], index: 3, kind: output, shape index: {0}]
  %s4 = inlined_call_operand.hbm [shape: f32[2,8,32], index: 4, kind: output, shape index: {1}]
  %5 = xla_tuple %s3, %s4
  %s6 = sld [smem:[#allocation0]]
  $region65: #{tpu_custom_call.1} parent=0
    _
  %s8 = ssub.s32 1, %s6
  %s9 = scalar_select 0, %s8, %s6
  $region1: #{tpu_custom_call.1} parent=0
    #allocation2 [shape = 'u8[8192]{0}', space=vmem, size = 0x2000, scoped, tag = 'input window, operand 0']
    #allocation3 [shape = 's32[2]{0}', space=sflag, size = 0x8, scoped, tag = 'scoped memory for tpu_custom_call.1']
    #allocation4 [shape = 's32[2]{0}', space=sflag, size = 0x8, scoped, tag = 'scoped memory for tpu_custom_call.1']
    #allocation5 [shape = 'u8[16384]{0}', space=vmem, size = 0x4000, scoped, tag = 'input window, operand 1, single buffered']
    #allocation6 [shape = 's32[1]{0}', space=sflag, size = 0x4, scoped, tag = 'scoped memory for tpu_custom_call.1']
    #allocation7 [shape = 'u8[16384]{0}', space=vmem, size = 0x4000, scoped, tag = 'input window, operand 2, single buffered']
    #allocation8 [shape = 'u8[8192]{0}', space=vmem, size = 0x2000, scoped, tag = 'output window, operand 0']
    #allocation9 [shape = 'u8[8192]{0}', space=vmem, size = 0x2000, scoped, tag = 'output window, operand 1']
    #allocation10 [shape = 's32[2]{0}', space=sflag, size = 0x8, scoped, tag = 'scoped memory for tpu_custom_call.1']
    %10 = vsyncpa [#allocation3], 0
    %s11 = scalar_lea.sflag [#allocation3], 1
    %12 = vsyncpa %s11, 0
    %13 = vsyncpa [#allocation6], 0
    %14 = vsyncpa [#allocation4], 0
    %s15 = scalar_lea.sflag [#allocation4], 1
    %16 = vsyncpa %s15, 0
    %17 = vsyncpa [#allocation10], 0
    %s18 = scalar_lea.sflag [#allocation10], 1
    %19 = vsyncpa %s18, 0
    loop: start=0, step=1, limit=4
    $region2: #{tpu_custom_call.1} parent=1 // loop_pre_header
      _
    $region3: #{tpu_custom_call.1} parent=1 // loop_header
      %s21 = sphi 0, %s25
      %p22 = scmp.ge.s32.totalorder %s21, 4
      %s28 = sphi 0, %s40
      %s29 = sphi 0, %s36
      %s30 = sphi 0, %s28
      %s31 = sphi 0, %s29
      %s32 = sphi 0, %s30
      %s33 = sphi 0, %s31
      %s45 = sphi 0, %s47
      %s48 = sphi 0, %s45
      %s49 = sphi 0, %s48
      %s65 = sphi 0, %s49
      %s69 = sphi 0, %s69
      %s71 = sphi 0, %s69
      %s72 = sphi 0, %s71
      %s86 = sphi 0, %s72
      %s90 = sphi 0, %s90
      %s92 = sphi 0, %s90
      %s93 = sphi 0, %s92
      %s107 = sphi 0, %s93
      %s115 = sphi 0, %s117
      %s118 = sphi 0, %s115
      %s119 = sphi 0, %s118
      %s135 = sphi 0, %s119
      %s143 = sphi 0, %s145
      %s146 = sphi 0, %s143
      %s147 = sphi 0, %s146
      %s163 = sphi 0, %s147
    $region4: #{tpu_custom_call.1} parent=1 // loop_header_branch
      %24 = sbr.rel (%p22) target = $region8
    $region5: #{tpu_custom_call.1} parent=1 // loop_body
      %s26 = ssub.s32 %s21, 1
      %s27 = ssub.s32 %s21, 2
      %s34 = sadd.s32 1, %s29
      %p35 = scmp.ge.s32.totalorder %s34, 1
      %s36 = scalar_select %p35, 0, %s34
      %s37 = sadd.s32 1, %s28
      %s38 = scalar_select %p35, %s37, %s28
      %p39 = scmp.ge.s32.totalorder %s38, 2
      %s40 = scalar_select %p39, 0, %s38
      %s41 = ssub.s32 %s28, %s40
      %s42 = ssub.s32 %s29, %s36
      %s43 = sor.u32 %s41, %s42
      %p44 = scmp.eq.s32.totalorder %s43, 0
      %s46 = sadd.s32 %s45, 1
      %s47 = scalar_select %p44, %s45, %s46
      %p50 = pneg %p44
      %p51 = scmp.eq.s32.totalorder %s21, 1
      %p52 = por %p50, %p51
      %p53 = scmp.ne.s32.totalorder %s45, %s48
      %p54 = scmp.eq.s32.totalorder %s21, 0
      %p55 = por %p53, %p54
      %p56 = scmp.ne.s32.totalorder %s45, %s48
      %p57 = scmp.eq.s32.totalorder %s26, 1
      %p58 = por %p56, %p57
      %p59 = scmp.ne.s32.totalorder %s48, %s49
      %p60 = scmp.eq.s32.totalorder %s26, 0
      %p61 = por %p59, %p60
      %p62 = scmp.ne.s32.totalorder %s48, %s49
      %p63 = scmp.eq.s32.totalorder %s27, 1
      %p64 = por %p62, %p63
      %p66 = scmp.ne.s32.totalorder %s49, %s65
      %p67 = scmp.eq.s32.totalorder %s27, 0
      %p68 = por %p66, %p67
      %s70 = sadd.s32 %s69, 1
      %p73 = scmp.eq.s32.totalorder %s21, 1
      %p74 = scmp.ne.s32.totalorder %s69, %s71
      %p75 = scmp.eq.s32.totalorder %s21, 0
      %p76 = por %p74, %p75
      %p77 = scmp.ne.s32.totalorder %s69, %s71
      %p78 = scmp.eq.s32.totalorder %s26, 1
      %p79 = por %p77, %p78
      %p80 = scmp.ne.s32.totalorder %s71, %s72
      %p81 = scmp.eq.s32.totalorder %s26, 0
      %p82 = por %p80, %p81
      %p83 = scmp.ne.s32.totalorder %s71, %s72
      %p84 = scmp.eq.s32.totalorder %s27, 1
      %p85 = por %p83, %p84
      %p87 = scmp.ne.s32.totalorder %s72, %s86
      %p88 = scmp.eq.s32.totalorder %s27, 0
      %p89 = por %p87, %p88
      %s91 = sadd.s32 %s90, 1
      %p94 = scmp.eq.s32.totalorder %s21, 1
      %p95 = scmp.ne.s32.totalorder %s90, %s92
      %p96 = scmp.eq.s32.totalorder %s21, 0
      %p97 = por %p95, %p96
      %p98 = scmp.ne.s32.totalorder %s90, %s92
      %p99 = scmp.eq.s32.totalorder %s26, 1
      %p100 = por %p98, %p99
      %p101 = scmp.ne.s32.totalorder %s92, %s93
      %p102 = scmp.eq.s32.totalorder %s26, 0
      %p103 = por %p101, %p102
      %p104 = scmp.ne.s32.totalorder %s92, %s93
      %p105 = scmp.eq.s32.totalorder %s27, 1
      %p106 = por %p104, %p105
      %p108 = scmp.ne.s32.totalorder %s93, %s107
      %p109 = scmp.eq.s32.totalorder %s27, 0
      %p110 = por %p108, %p109
      %s111 = ssub.s32 %s28, %s40
      %s112 = ssub.s32 %s29, %s36
      %s113 = sor.u32 %s111, %s112
      %p114 = scmp.eq.s32.totalorder %s113, 0
      %s116 = sadd.s32 %s115, 1
      %s117 = scalar_select %p114, %s115, %s116
      %p120 = pneg %p114
      %p121 = scmp.eq.s32.totalorder %s21, 1
      %p122 = por %p120, %p121
      %p123 = scmp.ne.s32.totalorder %s115, %s118
      %p124 = scmp.eq.s32.totalorder %s21, 0
      %p125 = por %p123, %p124
      %p126 = scmp.ne.s32.totalorder %s115, %s118
      %p127 = scmp.eq.s32.totalorder %s26, 1
      %p128 = por %p126, %p127
      %p129 = scmp.ne.s32.totalorder %s118, %s119
      %p130 = scmp.eq.s32.totalorder %s26, 0
      %p131 = por %p129, %p130
      %p132 = scmp.ne.s32.totalorder %s118, %s119
      %p133 = scmp.eq.s32.totalorder %s27, 1
      %p134 = por %p132, %p133
      %p136 = scmp.ne.s32.totalorder %s119, %s135
      %p137 = scmp.eq.s32.totalorder %s27, 0
      %p138 = por %p136, %p137
      %s139 = ssub.s32 %s28, %s40
      %s140 = ssub.s32 %s29, %s36
      %s141 = sor.u32 %s139, %s140
      %p142 = scmp.eq.s32.totalorder %s141, 0
      %s144 = sadd.s32 %s143, 1
      %s145 = scalar_select %p142, %s143, %s144
      %p148 = pneg %p142
      %p149 = scmp.eq.s32.totalorder %s21, 1
      %p150 = por %p148, %p149
      %p151 = scmp.ne.s32.totalorder %s143, %s146
      %p152 = scmp.eq.s32.totalorder %s21, 0
      %p153 = por %p151, %p152
      %p154 = scmp.ne.s32.totalorder %s143, %s146
      %p155 = scmp.eq.s32.totalorder %s26, 1
      %p156 = por %p154, %p155
      %p157 = scmp.ne.s32.totalorder %s146, %s147
      %p158 = scmp.eq.s32.totalorder %s26, 0
      %p159 = por %p157, %p158
      %p160 = scmp.ne.s32.totalorder %s146, %s147
      %p161 = scmp.eq.s32.totalorder %s27, 1
      %p162 = por %p160, %p161
      %p164 = scmp.ne.s32.totalorder %s147, %s163
      %p165 = scmp.eq.s32.totalorder %s27, 0
      %p166 = por %p164, %p165
      %p167 = scmp.le.s32.totalorder 1, %s21
      %p168 = scmp.lt.s32.totalorder %s21, 3
      %p169 = pnand %p167, %p168
      %p170 = pneg %p169
      // Predicated region
      $region9: #{tpu_custom_call.1} parent=5 // pred_check
        _
      $region10: #{tpu_custom_call.1} parent=5 // pred_check_branch
        %172 = sbr.rel (%p169) target = $region12
      $region11: #{tpu_custom_call.1} parent=5 // pred_region
        %s173 = ssub.s32 %s21, 1
        // Predicated region
        $region13: #{tpu_custom_call.1} parent=11 // pred_check
          %p174 = pneg %p82
        $region14: #{tpu_custom_call.1} parent=11 // pred_check_branch
          %176 = sbr.rel (%p174) target = $region16
        $region15: #{tpu_custom_call.1} parent=11 // pred_region
          %s178 = ssub.s32 512, 512
          %179 = vsyncadd [#allocation6], %s178
          %s180 = sshll.u32 [#allocation5], 4
          %s181 = int_to_ptr.vmem [resolvable:$true] %s180
          %186 = dma.hbm_to_vmem [thread:$0]  %s1, 512, %s181, [#allocation6], 128, 128, 8
        $region16: #{tpu_custom_call.1} parent=11 // pred_fallthru
          _
        // Predicated region
        $region17: #{tpu_custom_call.1} parent=11 // pred_check
          %p187 = pneg %p103
        $region18: #{tpu_custom_call.1} parent=11 // pred_check_branch
          %189 = sbr.rel (%p187) target = $region20
        $region19: #{tpu_custom_call.1} parent=11 // pred_region
          %s191 = ssub.s32 512, 512
          %192 = vsyncadd [#allocation6], %s191
          %s193 = sshll.u32 [#allocation7], 4
          %s194 = int_to_ptr.vmem [resolvable:$true] %s193
          %199 = dma.hbm_to_vmem [thread:$0]  %s2, 512, %s194, [#allocation6], 128, 128, 8
        $region20: #{tpu_custom_call.1} parent=11 // pred_fallthru
          _
      $region12: #{tpu_custom_call.1} parent=5 // pred_fallthru
        _
      %p200 = scmp.lt.s32.totalorder %s21, 2
      // Predicated region
      $region21: #{tpu_custom_call.1} parent=5 // pred_check
        %p201 = pneg %p200
      $region22: #{tpu_custom_call.1} parent=5 // pred_check_branch
        %203 = sbr.rel (%p201) target = $region24
      $region23: #{tpu_custom_call.1} parent=5 // pred_region
        // Predicated region
        $region25: #{tpu_custom_call.1} parent=23 // pred_check
          %p204 = pneg %p55
        $region26: #{tpu_custom_call.1} parent=23 // pred_check_branch
          %206 = sbr.rel (%p204) target = $region28
        $region27: #{tpu_custom_call.1} parent=23 // pred_region
          %s207 = sand.u32 %s45, 1
          %s208 = scalar_lea.sflag [#allocation3], %s207
          %s209 = sand.u32 %s45, 1
          %s210 = smul.addr %s209, 8
          %s211 = scalar_lea.vmem [#allocation2], %s210
          %s213 = ssub.s32 128, 128
          %214 = vsyncadd %s208, %s213
          %s215 = sadd.s32 %s29, %s28
          %s216 = smul.addr %s215, 128
          %s217 = scalar_lea.hbm %s0, %s216
          %s219 = sshll.u32 %s211, 4
          %s220 = int_to_ptr.vmem [resolvable:$true] %s219
          %222 = dma.hbm_to_vmem [thread:$0]  %s217, 128, %s220, %s208
        $region28: #{tpu_custom_call.1} parent=23 // pred_fallthru
          _
      $region24: #{tpu_custom_call.1} parent=5 // pred_fallthru
        _
      %p223 = scmp.le.s32.totalorder 1, %s21
      %p224 = scmp.lt.s32.totalorder %s21, 3
      %p225 = pnand %p223, %p224
      %p226 = pneg %p225
      // Predicated region
      $region29: #{tpu_custom_call.1} parent=5 // pred_check
        _
      $region30: #{tpu_custom_call.1} parent=5 // pred_check_branch
        %228 = sbr.rel (%p225) target = $region32
      $region31: #{tpu_custom_call.1} parent=5 // pred_region
        %s229 = ssub.s32 %s21, 1
        %s230 = sand.u32 %s48, 1
        %s231 = scalar_lea.sflag [#allocation3], %s230
        %s232 = sand.u32 %s48, 1
        %s233 = smul.addr %s232, 8
        %s234 = scalar_lea.vmem [#allocation2], %s233
        // Predicated region
        $region33: #{tpu_custom_call.1} parent=31 // pred_check
          %p235 = pneg %p61
        $region34: #{tpu_custom_call.1} parent=31 // pred_check_branch
          %237 = sbr.rel (%p235) target = $region36
        $region35: #{tpu_custom_call.1} parent=31 // pred_region
          %238 = dma.done %s231, 128
        $region36: #{tpu_custom_call.1} parent=31 // pred_fallthru
          _
        // Predicated region
        $region37: #{tpu_custom_call.1} parent=31 // pred_check
          %p239 = pneg %p82
        $region38: #{tpu_custom_call.1} parent=31 // pred_check_branch
          %241 = sbr.rel (%p239) target = $region40
        $region39: #{tpu_custom_call.1} parent=31 // pred_region
          %242 = dma.done [#allocation6], 512
        $region40: #{tpu_custom_call.1} parent=31 // pred_fallthru
          _
        // Predicated region
        $region41: #{tpu_custom_call.1} parent=31 // pred_check
          %p243 = pneg %p103
        $region42: #{tpu_custom_call.1} parent=31 // pred_check_branch
          %245 = sbr.rel (%p243) target = $region44
        $region43: #{tpu_custom_call.1} parent=31 // pred_region
          %246 = dma.done [#allocation6], 512
        $region44: #{tpu_custom_call.1} parent=31 // pred_fallthru
          _
        %s247 = sand.u32 %s48, 1
        %s248 = scalar_lea.sflag [#allocation3], %s247
        %s249 = sand.u32 %s48, 1
        %s250 = smul.addr %s249, 8
        %s251 = scalar_lea.vmem [#allocation2], %s250
        %p252 = pneg %p61
        %p253 = pneg %p58
        %p254 = pneg %p82
        %p255 = pneg %p79
        %p256 = pneg %p103
        %p257 = pneg %p100
        %p258 = pneg %p131
        %p259 = pneg %p128
        %s260 = sand.u32 %s118, 1
        %s261 = scalar_lea.sflag [#allocation4], %s260
        %s262 = sand.u32 %s118, 1
        %s263 = smul.addr %s262, 8
        %s264 = scalar_lea.vmem [#allocation8], %s263
        %p265 = pneg %p159
        %p266 = pneg %p156
        %s267 = sand.u32 %s146, 1
        %s268 = scalar_lea.sflag [#allocation10], %s267
        %s269 = sand.u32 %s146, 1
        %s270 = smul.addr %s269, 8
        %s271 = scalar_lea.vmem [#allocation9], %s270
        %v272 = vld [vmem:[%s234] sm:$0xff]
        %v273 = vld [vmem:[#allocation5] sm:$0xff]
        %v274 = vld [vmem:[#allocation5 + $0x8] sm:$0xff]
        %v275 = vld [vmem:[#allocation5 + $0x10] sm:$0xff]
        %v276 = vld [vmem:[#allocation5 + $0x18] sm:$0xff]
        %vm277 = vcmask 261120
        %v279 = vsel %vm277, %v272, 0
        %281 = vmatprep.subr.mxu0 0.0
        %282 = vmatpush1.msra.mxu0 %v273
        %283 = vmatprep.subr.mxu0 0.0
        %284 = vmatpush1.msra.mxu0 %v274
        %285 = vmatprep.subr.mxu0 0.0
        %286 = vmatpush1.msra.mxu0 %v275
        %287 = vmatprep.subr.mxu0 0.0
        %288 = vmatpush1.msra.mxu0 %v276
        %289 = vmatprep.subr.mxu0 0.0
        %290 = vmatpush1.msra.mxu0 0.0
        %291 = vmatprep.subr.mxu0 0.0
        %292 = vmatpush1.msra.mxu0 0.0
        %293 = vmatprep.subr.mxu0 0.0
        %294 = vmatpush1.msra.mxu0 0.0
        %295 = vmatprep.subr.mxu0 0.0
        %296 = vmatpush1.msra.mxu0 0.0
        %297 = vmatprep.subr.mxu0 0.0
        %298 = vmatpush1.msra.mxu0 0.0
        %299 = vmatprep.subr.mxu0 0.0
        %300 = vmatpush1.msra.mxu0 0.0
        %301 = vmatprep.subr.mxu0 0.0
        %302 = vmatpush1.msra.mxu0 0.0
        %303 = vmatprep.subr.mxu0 0.0
        %304 = vmatpush1.msra.mxu0 0.0
        %305 = vmatprep.subr.mxu0 0.0
        %306 = vmatpush1.msra.mxu0 0.0
        %307 = vmatprep.subr.mxu0 0.0
        %308 = vmatpush1.msra.mxu0 0.0
        %309 = vmatprep.subr.mxu0 0.0
        %310 = vmatpush1.msra.mxu0 0.0
        %311 = vmatprep.subr.mxu0 0.0
        %312 = vmatpush1.msra.mxu0 0.0
        %313 = vmatprep.subr.mxu0 0.0
        %314 = vmatpush1.msra.mxu0 0.0
        %315 = vmatprep.subr.mxu0 0.0
        %316 = vmatpush1.msra.mxu0 0.0
        %317 = vmatprep.subr.mxu0 0.0
        %318 = vmatpush1.msra.mxu0 0.0
        %319 = vmatprep.subr.mxu0 0.0
        %320 = vmatpush1.msra.mxu0 0.0
        %321 = vmatprep.subr.mxu0 0.0
        %322 = vmatpush1.msra.mxu0 0.0
        %323 = vmatprep.subr.mxu0 0.0
        %324 = vmatpush1.msra.mxu0 0.0
        %325 = vmatprep.subr.mxu0 0.0
        %326 = vmatpush1.msra.mxu0 0.0
        %327 = vmatprep.subr.mxu0 0.0
        %328 = vmatpush1.msra.mxu0 0.0
        %329 = vmatprep.subr.mxu0 0.0
        %330 = vmatpush1.msra.mxu0 0.0
        %331 = vmatprep.subr.mxu0 0.0
        %332 = vmatpush1.msra.mxu0 0.0
        %333 = vmatprep.subr.mxu0 0.0
        %334 = vmatpush1.msra.mxu0 0.0
        %335 = vmatprep.subr.mxu0 0.0
        %336 = vmatpush1.msra.mxu0 0.0
        %337 = vmatprep.subr.mxu0 0.0
        %338 = vmatpush1.msra.mxu0 0.0
        %339 = vmatprep.subr.mxu0 0.0
        %340 = vmatpush1.msra.mxu0 0.0
        %341 = vmatprep.subr.mxu0 0.0
        %342 = vmatpush1.msra.mxu0 0.0
        %343 = vmatprep.subr.mxu0 0.0
        %344 = vmatpush1.msra.mxu0 0.0
        %345 = vmatprep.mubr.f32.mxu0 0.0
        %346 = vmatmul.mubr.f32.gmra.mrb[0].mxu0 %v279
        %v347 = vpop.f32.mrb[0].mxu0
        %v348 = vadd.f32 0.0, %v347
        %v349 = vpop.f32.mrb[0].mxu0
        %350 = vdwg.mxu0
        %351 = vst.msk [vmem:[%s264] sm:$0xff] %vm277, %v348
        %v352 = vld [vmem:[#allocation7] sm:$0xff]
        %v353 = vld [vmem:[#allocation7 + $0x8] sm:$0xff]
        %v354 = vld [vmem:[#allocation7 + $0x10] sm:$0xff]
        %v355 = vld [vmem:[#allocation7 + $0x18] sm:$0xff]
        %356 = vmatprep.subr.mxu0 0.0
        %357 = vmatpush1.msra.mxu0 %v352
        %358 = vmatprep.subr.mxu0 0.0
        %359 = vmatpush1.msra.mxu0 %v353
        %360 = vmatprep.subr.mxu0 0.0
        %361 = vmatpush1.msra.mxu0 %v354
        %362 = vmatprep.subr.mxu0 0.0
        %363 = vmatpush1.msra.mxu0 %v355
        %364 = vmatprep.subr.mxu0 0.0
        %365 = vmatpush1.msra.mxu0 0.0
        %366 = vmatprep.subr.mxu0 0.0
        %367 = vmatpush1.msra.mxu0 0.0
        %368 = vmatprep.subr.mxu0 0.0
        %369 = vmatpush1.msra.mxu0 0.0
        %370 = vmatprep.subr.mxu0 0.0
        %371 = vmatpush1.msra.mxu0 0.0
        %372 = vmatprep.subr.mxu0 0.0
        %373 = vmatpush1.msra.mxu0 0.0
        %374 = vmatprep.subr.mxu0 0.0
        %375 = vmatpush1.msra.mxu0 0.0
        %376 = vmatprep.subr.mxu0 0.0
        %377 = vmatpush1.msra.mxu0 0.0
        %378 = vmatprep.subr.mxu0 0.0
        %379 = vmatpush1.msra.mxu0 0.0
        %380 = vmatprep.subr.mxu0 0.0
        %381 = vmatpush1.msra.mxu0 0.0
        %382 = vmatprep.subr.mxu0 0.0
        %383 = vmatpush1.msra.mxu0 0.0
        %384 = vmatprep.subr.mxu0 0.0
        %385 = vmatpush1.msra.mxu0 0.0
        %386 = vmatprep.subr.mxu0 0.0
        %387 = vmatpush1.msra.mxu0 0.0
        %388 = vmatprep.subr.mxu0 0.0
        %389 = vmatpush1.msra.mxu0 0.0
        %390 = vmatprep.subr.mxu0 0.0
        %391 = vmatpush1.msra.mxu0 0.0
        %392 = vmatprep.subr.mxu0 0.0
        %393 = vmatpush1.msra.mxu0 0.0
        %394 = vmatprep.subr.mxu0 0.0
        %395 = vmatpush1.msra.mxu0 0.0
        %396 = vmatprep.subr.mxu0 0.0
        %397 = vmatpush1.msra.mxu0 0.0
        %398 = vmatprep.subr.mxu0 0.0
        %399 = vmatpush1.msra.mxu0 0.0
        %400 = vmatprep.subr.mxu0 0.0
        %401 = vmatpush1.msra.mxu0 0.0
        %402 = vmatprep.subr.mxu0 0.0
        %403 = vmatpush1.msra.mxu0 0.0
        %404 = vmatprep.subr.mxu0 0.0
        %405 = vmatpush1.msra.mxu0 0.0
        %406 = vmatprep.subr.mxu0 0.0
        %407 = vmatpush1.msra.mxu0 0.0
        %408 = vmatprep.subr.mxu0 0.0
        %409 = vmatpush1.msra.mxu0 0.0
        %410 = vmatprep.subr.mxu0 0.0
        %411 = vmatpush1.msra.mxu0 0.0
        %412 = vmatprep.subr.mxu0 0.0
        %413 = vmatpush1.msra.mxu0 0.0
        %414 = vmatprep.subr.mxu0 0.0
        %415 = vmatpush1.msra.mxu0 0.0
        %416 = vmatprep.subr.mxu0 0.0
        %417 = vmatpush1.msra.mxu0 0.0
        %418 = vmatprep.subr.mxu0 0.0
        %419 = vmatpush1.msra.mxu0 0.0
        %420 = vmatprep.mubr.f32.mxu0 0.0
        %421 = vmatmul.mubr.f32.gmra.mrb[0].mxu0 %v279
        %v422 = vpop.f32.mrb[0].mxu0
        %v423 = vadd.f32 0.0, %v422
        %v424 = vpop.f32.mrb[0].mxu0
        %425 = vdwg.mxu0
        %426 = vst.msk [vmem:[%s271] sm:$0xff] %vm277, %v423
        %s427 = sand.u32 %s118, 1
        %s428 = scalar_lea.sflag [#allocation4], %s427
        %s429 = sand.u32 %s118, 1
        %s430 = smul.addr %s429, 8
        %s431 = scalar_lea.vmem [#allocation8], %s430
        %s432 = sand.u32 %s146, 1
        %s433 = scalar_lea.sflag [#allocation10], %s432
        %s434 = sand.u32 %s146, 1
        %s435 = smul.addr %s434, 8
        %s436 = scalar_lea.vmem [#allocation9], %s435
        // Predicated region
        $region45: #{tpu_custom_call.1} parent=31 // pred_check
          %p437 = pneg %p128
        $region46: #{tpu_custom_call.1} parent=31 // pred_check_branch
          %439 = sbr.rel (%p437) target = $region48
        $region47: #{tpu_custom_call.1} parent=31 // pred_region
          %s441 = ssub.s32 128, 128
          %442 = vsyncadd %s428, %s441
          %s443 = sadd.s32 %s31, %s30
          %s444 = smul.addr %s443, 128
          %s445 = scalar_lea.hbm %s3, %s444
          %s447 = sshll.u32 %s431, 4
          %s448 = int_to_ptr.vmem [resolvable:$true] %s447
          %450 = dma.vmem_to_hbm [thread:$0]  %s448, 128, %s445, %s428
        $region48: #{tpu_custom_call.1} parent=31 // pred_fallthru
          _
        // Predicated region
        $region49: #{tpu_custom_call.1} parent=31 // pred_check
          %p451 = pneg %p156
        $region50: #{tpu_custom_call.1} parent=31 // pred_check_branch
          %453 = sbr.rel (%p451) target = $region52
        $region51: #{tpu_custom_call.1} parent=31 // pred_region
          %s455 = ssub.s32 128, 128
          %456 = vsyncadd %s433, %s455
          %s457 = sadd.s32 %s31, %s30
          %s458 = smul.addr %s457, 128
          %s459 = scalar_lea.hbm %s4, %s458
          %s461 = sshll.u32 %s436, 4
          %s462 = int_to_ptr.vmem [resolvable:$true] %s461
          %464 = dma.vmem_to_hbm [thread:$0]  %s462, 128, %s459, %s433
        $region52: #{tpu_custom_call.1} parent=31 // pred_fallthru
          _
      $region32: #{tpu_custom_call.1} parent=5 // pred_fallthru
        _
      %p465 = scmp.le.s32.totalorder 2, %s21
      // Predicated region
      $region53: #{tpu_custom_call.1} parent=5 // pred_check
        %p466 = pneg %p465
      $region54: #{tpu_custom_call.1} parent=5 // pred_check_branch
        %468 = sbr.rel (%p466) target = $region56
      $region55: #{tpu_custom_call.1} parent=5 // pred_region
        %s469 = ssub.s32 %s21, 2
        // Predicated region
        $region57: #{tpu_custom_call.1} parent=55 // pred_check
          %p470 = pneg %p134
        $region58: #{tpu_custom_call.1} parent=55 // pred_check_branch
          %472 = sbr.rel (%p470) target = $region60
        $region59: #{tpu_custom_call.1} parent=55 // pred_region
          %s473 = sand.u32 %s119, 1
          %s474 = scalar_lea.sflag [#allocation4], %s473
          %s475 = sand.u32 %s119, 1
          %s476 = smul.addr %s475, 8
          %s477 = scalar_lea.vmem [#allocation8], %s476
          %478 = dma.done %s474, 128
        $region60: #{tpu_custom_call.1} parent=55 // pred_fallthru
          _
        // Predicated region
        $region61: #{tpu_custom_call.1} parent=55 // pred_check
          %p479 = pneg %p162
        $region62: #{tpu_custom_call.1} parent=55 // pred_check_branch
          %481 = sbr.rel (%p479) target = $region64
        $region63: #{tpu_custom_call.1} parent=55 // pred_region
          %s482 = sand.u32 %s147, 1
          %s483 = scalar_lea.sflag [#allocation10], %s482
          %s484 = sand.u32 %s147, 1
          %s485 = smul.addr %s484, 8
          %s486 = scalar_lea.vmem [#allocation9], %s485
          %487 = dma.done %s483, 128
        $region64: #{tpu_custom_call.1} parent=55 // pred_fallthru
          _
      $region56: #{tpu_custom_call.1} parent=5 // pred_fallthru
        _
    $region6: #{tpu_custom_call.1} parent=1 // loop_footer
      %s25 = sadd.s32 1, %s21
    $region7: #{tpu_custom_call.1} parent=1 // loop_footer_branch
      %20 = sbr.rel target = $region3
    $region8: #{tpu_custom_call.1} parent=1 // loop_exit
      _
    %488 = vsyncpa [#allocation3], 1
    %s489 = scalar_lea.sflag [#allocation3], 1
    %490 = vsyncpa %s489, 1
    %491 = vsyncpa [#allocation6], 1
    %492 = vsyncpa [#allocation4], 1
    %s493 = scalar_lea.sflag [#allocation4], 1
    %494 = vsyncpa %s493, 1
    %495 = vsyncpa [#allocation10], 1
    %s496 = scalar_lea.sflag [#allocation10], 1
    %497 = vsyncpa %s496, 1

</llo_original>
